<compile_context>
chip_gen: v6e
topology: v6e:2x2x1
jax: 0.10.0
libtpu: 0.0.40
codegen_flags: <defaults>
</compile_context>

<pallas_src>
import functools

import jax
import jax.numpy as jnp
from jax.experimental import pallas as pl
from jax.experimental.pallas import tpu as pltpu

LANES = 128
PAD_LOGIT = -1.0e4  # 0.5*tanh(0.5*-1e4)+0.5 == 0.0 exactly in f32


def _round_up(x, m):
    return ((x + m - 1) // m) * m


def _tversky_kernel(x_ref, m_ref, part_ref, *, block_rows, blocks_per_split,
                    valid_rows, mask_tail):
    """Accumulate per-core partial sums of (p*m, p, m).

    part_ref: (1, 3, 8, LANES) f32 output block.  Its block index depends only
    on the "parallel" core-split axis, so it stays resident in VMEM across the
    inner "arbitrary" axis and acts as this core's accumulator.
    """
    c = pl.program_id(0)   # core-split axis ("parallel")
    j = pl.program_id(1)   # reduction axis ("arbitrary")

    @pl.when(j == 0)
    def _init():
        part_ref[...] = jnp.zeros_like(part_ref)

    # Load in native dtype, upcast immediately (keeps v5e off bf16 vector paths).
    x = x_ref[...].astype(jnp.float32)
    m = m_ref[...].astype(jnp.float32)

    # sigmoid via tanh: one EUP push + two VPU ops, no per-element divide.
    p = 0.5 * jnp.tanh(0.5 * x) + 0.5

    if mask_tail:
        # Zero rows past the real data: covers the ragged last block and the
        # clamped duplicate block the shorter core may see.  (8, 1)-shaped
        # compare broadcast over lanes -> a handful of VPU ops per tile.
        row0 = (c * blocks_per_split + j) * block_rows
        rid = jax.lax.broadcasted_iota(jnp.int32, (block_rows, 1), 0) + row0
        keep = rid < valid_rows
        p = jnp.where(keep, p, 0.0)
        m = jnp.where(keep, m, 0.0)

    # Fold the (block_rows, 128) tile into (8, 128) vreg-shaped partials with
    # pure VALU adds; the tiny cross-lane reduce happens in the JAX wrapper.
    g = block_rows // 8
    part_ref[0, 0] += (p * m).reshape(g, 8, LANES).sum(axis=0)   # true pos
    part_ref[0, 1] += p.reshape(g, 8, LANES).sum(axis=0)         # sum(p)
    part_ref[0, 2] += m.reshape(g, 8, LANES).sum(axis=0)         # sum(m)


def tversky_loss(outputs, masks, alpha=0.2, beta=0.8, smooth=1.0,
                 block_rows=2048):
    """Pallas implementation of TverskyLoss.forward (returns a scalar f32).

    squeeze(1) in the reference is shape-only; the global sums are unaffected,
    so everything is flattened to a lane-dense (rows, 128) view in its native
    dtype (no wrapper-side astype).
    """
    o = outputs.reshape(-1)
    m = masks.reshape(-1)
    if jnp.issubdtype(m.dtype, jnp.bool_):
        m = m.astype(jnp.int8)           # 1 B/elem stream; upcast in-kernel
    assert o.shape[0] == m.shape[0], (o.shape, m.shape)
    n = o.shape[0]

    # Minimal tail pad ONLY when n is not lane-aligned (needed for the free
    # (rows, 128) reshape).  Padded logits -> p == 0 exactly, padded masks -> 0,
    # so padding contributes nothing to any of the three sums.
    rem = n % LANES
    if rem:
        o = jnp.pad(o, (0, LANES - rem), constant_values=PAD_LOGIT)
        m = jnp.pad(m, (0, LANES - rem), constant_values=0)
    rows = o.shape[0] // LANES
    o2 = o.reshape(rows, LANES)
    m2 = m.reshape(rows, LANES)

    # Row tile: multiple of 32 so one block shape satisfies the min-tile rules
    # for f32 (8,128), bf16 (16,128) and int8/bool (32,128) inputs alike.
    br = _round_up(min(int(block_rows), rows), 32)
    n_blocks = pl.cdiv(rows, br)

    # 2-way core split (v7x megacore); runs sequentially (harmless) on v5e/v6e.
    splits = 2 if n_blocks >= 2 else 1
    bpc = pl.cdiv(n_blocks, splits)
    # In-kernel masking is only needed if some block overhangs the array or a
    # core sees a clamped duplicate block.
    mask_tail = (splits * bpc * br) != rows

    kernel = functools.partial(
        _tversky_kernel, block_rows=br, blocks_per_split=bpc,
        valid_rows=rows, mask_tail=mask_tail)

    # Clamp block indices so the rounded-up per-core block count never issues
    # a fully out-of-bounds DMA (the duplicate block is masked to zero anyway).
    idx = lambda c, j: (jnp.minimum(c * bpc + j, n_blocks - 1), 0)
    in_spec = pl.BlockSpec((br, LANES), idx)
    out_spec = pl.BlockSpec((1, 3, 8, LANES), lambda c, j: (c, 0, 0, 0))

    parts = pl.pallas_call(
        kernel,
        out_shape=jax.ShapeDtypeStruct((splits, 3, 8, LANES), jnp.float32),
        grid_spec=pltpu.PrefetchScalarGridSpec(
            num_scalar_prefetch=0,
            grid=(splits, bpc),
            in_specs=[in_spec, in_spec],
            out_specs=out_spec,
        ),
        compiler_params=pltpu.CompilerParams(
            dimension_semantics=("parallel", "arbitrary")),
    )(o2, m2)

    # Tiny final combine + Tversky divide in plain JAX (splits*3*8*128 floats).
    sums = jnp.sum(parts, axis=(0, 2, 3))
    tp, sp, sm = sums[0], sums[1], sums[2]
    fp = sp - tp   # sum((1 - m) * p)
    fn = sm - tp   # sum(m * (1 - p))
    tversky = (tp + smooth) / (tp + alpha * fp + beta * fn + smooth)
    return 1.0 - tversky


def _reference(outputs, masks, alpha=0.2, beta=0.8, smooth=1.0):
    p = jax.nn.sigmoid(outputs.astype(jnp.float32)).reshape(-1)
    m = masks.astype(jnp.float32).reshape(-1)
    tp = jnp.sum(p * m)
    fp = jnp.sum((1.0 - m) * p)
    fn = jnp.sum(m * (1.0 - p))
    return 1.0 - (tp + smooth) / (tp + alpha * fp + beta * fn + smooth)


def _check(outputs, masks, **kw):
    loss = jax.block_until_ready(tversky_loss(outputs, masks, **kw))
    ref = _reference(outputs, masks)
    assert jnp.allclose(loss, ref, atol=1e-4, rtol=1e-4), (loss, ref)


if __name__ == "__main__":
    key = jax.random.PRNGKey(0)
    k1, k2, k3, k4, k5, k6, k7, k8 = jax.random.split(key, 8)

    # A) f32 logits + f32 masks, NCHW (2,1,16,16): lane-aligned, masked tail rows.
    out_a = jax.random.normal(k1, (2, 1, 16, 16), dtype=jnp.float32)
    msk_a = (jax.random.uniform(k2, (2, 1, 16, 16)) > 0.5).astype(jnp.float32)
    _check(out_a, msk_a)

    # B) bf16 logits + f32 masks (native narrow-dtype streaming path).
    out_b = jax.random.normal(k3, (2, 1, 64, 32), dtype=jnp.bfloat16)
    msk_b = (jax.random.uniform(k4, (2, 1, 64, 32)) > 0.5).astype(jnp.float32)
    _check(out_b, msk_b)

    # C) ragged flat size (not a multiple of 128): exercises the minimal tail
    #    pad + in-kernel row masking.
    out_c = jax.random.normal(k5, (2, 1, 13, 15), dtype=jnp.float32)
    msk_c = (jax.random.uniform(k6, (2, 1, 13, 15)) > 0.5).astype(jnp.float32)
    _check(out_c, msk_c)

    # D) small block_rows to exercise the 2-way core split + multi-step
    #    accumulation (grid = (2, 2)) on a slightly larger input.
    out_d = jax.random.normal(k7, (8, 1, 32, 64), dtype=jnp.float32)
    msk_d = (jax.random.uniform(k8, (8, 1, 32, 64)) > 0.5).astype(jnp.float32)
    _check(out_d, msk_d, block_rows=32)

    print("KERNEL_OK")
</pallas_src>

<mosaic_0001>
module attributes {stable_mosaic.version = 11 : i64} {
  func.func @_tversky_kernel(%arg0: i32, %arg1: i32, %arg2: memref<32x128xf32, #tpu.memory_space<vmem>>, %arg3: memref<32x128xf32, #tpu.memory_space<vmem>>, %arg4: memref<1x3x8x128xf32, #tpu.memory_space<vmem>>) attributes {dimension_semantics = [#tpu.dimension_semantics<parallel>, #tpu.dimension_semantics<arbitrary>], iteration_bounds = array<i64: 1, 1>, scalar_prefetch = 0 : i64, scratch_operands = 0 : i64, tpu.core_type = #tpu.core_type<tc>, window_params = [{transform_indices = @transform_0, window_bounds = array<i64: 32, 128>}, {transform_indices = @transform_1, window_bounds = array<i64: 32, 128>}, {transform_indices = @transform_2, window_bounds = array<i64: 1, 3, 8, 128>}]} {
    %c0_i32 = arith.constant 0 : i32
    %0 = arith.cmpi eq, %arg1, %c0_i32 : i32
    %1 = arith.extui %0 : i1 to i32
    %c0_i32_0 = arith.constant 0 : i32
    %2 = arith.cmpi ne, %1, %c0_i32_0 : i32
    scf.if %2 {
      %cst_33 = arith.constant 0.000000e+00 : f32
      %53 = vector.broadcast %cst_33 : f32 to vector<1x3x8x128xf32>
      %c0_34 = arith.constant 0 : index
      %c0_35 = arith.constant 0 : index
      %c0_36 = arith.constant 0 : index
      %c0_37 = arith.constant 0 : index
      %54 = vector.load %arg4[%c0_34, %c0_35, %c0_36, %c0_37] : memref<1x3x8x128xf32, #tpu.memory_space<vmem>>, vector<1x3x8x128xf32>
      tpu.vector_store %arg4[%c0_34, %c0_35, %c0_36, %c0_37], %53 {strides = array<i32>} : memref<1x3x8x128xf32, #tpu.memory_space<vmem>>, vector<1x3x8x128xf32>,
    } else {
    }
    %c0 = arith.constant 0 : index
    %c0_1 = arith.constant 0 : index
    %3 = vector.load %arg2[%c0, %c0_1] : memref<32x128xf32, #tpu.memory_space<vmem>>, vector<32x128xf32>
    %c0_2 = arith.constant 0 : index
    %c0_3 = arith.constant 0 : index
    %4 = vector.load %arg3[%c0_2, %c0_3] : memref<32x128xf32, #tpu.memory_space<vmem>>, vector<32x128xf32>
    %cst = arith.constant 5.000000e-01 : f32
    %5 = vector.broadcast %cst : f32 to vector<32x128xf32>
    %6 = arith.mulf %5, %3 : vector<32x128xf32>
    %7 = math.tanh %6 : vector<32x128xf32>
    %cst_4 = arith.constant 5.000000e-01 : f32
    %8 = vector.broadcast %cst_4 : f32 to vector<32x128xf32>
    %9 = arith.mulf %8, %7 : vector<32x128xf32>
    %cst_5 = arith.constant 5.000000e-01 : f32
    %10 = vector.broadcast %cst_5 : f32 to vector<32x128xf32>
    %11 = arith.addf %9, %10 : vector<32x128xf32>
    %c1_i32 = arith.constant 1 : i32
    %12 = arith.muli %arg0, %c1_i32 : i32
    %13 = arith.addi %12, %arg1 : i32
    %c32_i32 = arith.constant 32 : i32
    %14 = arith.muli %13, %c32_i32 : i32
    %15 = tpu.iota {dimensions = array<i32: 0>} : vector<32x1xi32>
    %16 = vector.broadcast %14 : i32 to vector<32x1xi32>
    %17 = arith.addi %15, %16 : vector<32x1xi32>
    %c4_i32 = arith.constant 4 : i32
    %18 = vector.broadcast %c4_i32 : i32 to vector<32x1xi32>
    %19 = arith.cmpi slt, %17, %18 : vector<32x1xi32>
    %cst_6 = arith.constant 0.000000e+00 : f32
    %20 = vector.shape_cast %19 : vector<32x1xi1> to vector<32x1xi1>
    %21 = vector.broadcast %20 : vector<32x1xi1> to vector<32x128xi1>
    %22 = vector.broadcast %cst_6 : f32 to vector<32x128xf32>
    %23 = arith.select %21, %11, %22 : vector<32x128xi1>, vector<32x128xf32>
    %cst_7 = arith.constant 0.000000e+00 : f32
    %24 = vector.shape_cast %19 : vector<32x1xi1> to vector<32x1xi1>
    %25 = vector.broadcast %24 : vector<32x1xi1> to vector<32x128xi1>
    %26 = vector.broadcast %cst_7 : f32 to vector<32x128xf32>
    %27 = arith.select %25, %4, %26 : vector<32x128xi1>, vector<32x128xf32>
    %c0_8 = arith.constant 0 : index
    %c0_9 = arith.constant 0 : index
    %c0_10 = arith.constant 0 : index
    %c0_11 = arith.constant 0 : index
    %28 = vector.load %arg4[%c0_8, %c0_9, %c0_10, %c0_11] : memref<1x3x8x128xf32, #tpu.memory_space<vmem>>, vector<1x1x8x128xf32>
    %29 = vector.shape_cast %28 : vector<1x1x8x128xf32> to vector<8x128xf32>
    %30 = arith.mulf %23, %27 : vector<32x128xf32>
    %31 = vector.shape_cast %30 : vector<32x128xf32> to vector<4x8x128xf32>
    %cst_12 = arith.constant dense<0.000000e+00> : vector<8x128xf32>
    %32 = vector.multi_reduction <add>, %31, %cst_12 [0] : vector<4x8x128xf32> to vector<8x128xf32>
    %33 = arith.addf %29, %32 : vector<8x128xf32>
    %c0_13 = arith.constant 0 : index
    %c0_14 = arith.constant 0 : index
    %c0_15 = arith.constant 0 : index
    %c0_16 = arith.constant 0 : index
    %34 = vector.load %arg4[%c0_13, %c0_14, %c0_15, %c0_16] : memref<1x3x8x128xf32, #tpu.memory_space<vmem>>, vector<1x1x8x128xf32>
    %35 = vector.shape_cast %34 : vector<1x1x8x128xf32> to vector<8x128xf32>
    %36 = vector.shape_cast %33 : vector<8x128xf32> to vector<1x1x8x128xf32>
    tpu.vector_store %arg4[%c0_13, %c0_14, %c0_15, %c0_16], %36 {strides = array<i32>} : memref<1x3x8x128xf32, #tpu.memory_space<vmem>>, vector<1x1x8x128xf32>,
    %c0_17 = arith.constant 0 : index
    %c1 = arith.constant 1 : index
    %c0_18 = arith.constant 0 : index
    %c0_19 = arith.constant 0 : index
    %37 = vector.load %arg4[%c0_17, %c1, %c0_18, %c0_19] : memref<1x3x8x128xf32, #tpu.memory_space<vmem>>, vector<1x1x8x128xf32>
    %38 = vector.shape_cast %37 : vector<1x1x8x128xf32> to vector<8x128xf32>
    %39 = vector.shape_cast %23 : vector<32x128xf32> to vector<4x8x128xf32>
    %cst_20 = arith.constant dense<0.000000e+00> : vector<8x128xf32>
    %40 = vector.multi_reduction <add>, %39, %cst_20 [0] : vector<4x8x128xf32> to vector<8x128xf32>
    %41 = arith.addf %38, %40 : vector<8x128xf32>
    %c0_21 = arith.constant 0 : index
    %c1_22 = arith.constant 1 : index
    %c0_23 = arith.constant 0 : index
    %c0_24 = arith.constant 0 : index
    %42 = vector.load %arg4[%c0_21, %c1_22, %c0_23, %c0_24] : memref<1x3x8x128xf32, #tpu.memory_space<vmem>>, vector<1x1x8x128xf32>
    %43 = vector.shape_cast %42 : vector<1x1x8x128xf32> to vector<8x128xf32>
    %44 = vector.shape_cast %41 : vector<8x128xf32> to vector<1x1x8x128xf32>
    tpu.vector_store %arg4[%c0_21, %c1_22, %c0_23, %c0_24], %44 {strides = array<i32>} : memref<1x3x8x128xf32, #tpu.memory_space<vmem>>, vector<1x1x8x128xf32>,
    %c0_25 = arith.constant 0 : index
    %c2 = arith.constant 2 : index
    %c0_26 = arith.constant 0 : index
    %c0_27 = arith.constant 0 : index
    %45 = vector.load %arg4[%c0_25, %c2, %c0_26, %c0_27] : memref<1x3x8x128xf32, #tpu.memory_space<vmem>>, vector<1x1x8x128xf32>
    %46 = vector.shape_cast %45 : vector<1x1x8x128xf32> to vector<8x128xf32>
    %47 = vector.shape_cast %27 : vector<32x128xf32> to vector<4x8x128xf32>
    %cst_28 = arith.constant dense<0.000000e+00> : vector<8x128xf32>
    %48 = vector.multi_reduction <add>, %47, %cst_28 [0] : vector<4x8x128xf32> to vector<8x128xf32>
    %49 = arith.addf %46, %48 : vector<8x128xf32>
    %c0_29 = arith.constant 0 : index
    %c2_30 = arith.constant 2 : index
    %c0_31 = arith.constant 0 : index
    %c0_32 = arith.constant 0 : index
    %50 = vector.load %arg4[%c0_29, %c2_30, %c0_31, %c0_32] : memref<1x3x8x128xf32, #tpu.memory_space<vmem>>, vector<1x1x8x128xf32>
    %51 = vector.shape_cast %50 : vector<1x1x8x128xf32> to vector<8x128xf32>
    %52 = vector.shape_cast %49 : vector<8x128xf32> to vector<1x1x8x128xf32>
    tpu.vector_store %arg4[%c0_29, %c2_30, %c0_31, %c0_32], %52 {strides = array<i32>} : memref<1x3x8x128xf32, #tpu.memory_space<vmem>>, vector<1x1x8x128xf32>,
    return
  }
  func.func @transform_0(%arg0: i32, %arg1: i32) -> (i32, i32) {
    %c1_i32 = arith.constant 1 : i32
    %0 = arith.muli %arg0, %c1_i32 : i32
    %1 = arith.addi %0, %arg1 : i32
    %c0_i32 = arith.constant 0 : i32
    %2 = arith.minsi %1, %c0_i32 : i32
    %c0_i32_0 = arith.constant 0 : i32
    %c0_i32_1 = arith.constant 0 : i32
    return %2, %c0_i32_0 : i32, i32
  }
  func.func @transform_1(%arg0: i32, %arg1: i32) -> (i32, i32) {
    %c1_i32 = arith.constant 1 : i32
    %0 = arith.muli %arg0, %c1_i32 : i32
    %1 = arith.addi %0, %arg1 : i32
    %c0_i32 = arith.constant 0 : i32
    %2 = arith.minsi %1, %c0_i32 : i32
    %c0_i32_0 = arith.constant 0 : i32
    %c0_i32_1 = arith.constant 0 : i32
    return %2, %c0_i32_0 : i32, i32
  }
  func.func @transform_2(%arg0: i32, %arg1: i32) -> (i32, i32, i32, i32) {
    %c0_i32 = arith.constant 0 : i32
    %c0_i32_0 = arith.constant 0 : i32
    %c0_i32_1 = arith.constant 0 : i32
    %c0_i32_2 = arith.constant 0 : i32
    return %arg0, %c0_i32, %c0_i32_0, %c0_i32_1 : i32, i32, i32, i32
  }
}

</mosaic_0001>

<llo_original>
// kernel: tpu_custom_call.1
$region0: #{tpu_custom_call.1}
  #allocation0 [shape = 'u32[]', space=smem, size = 0x4, offset = 0x4, fixed_abs, tag = 'smem constant byte address 0x4 - core index']
  #allocation1 [shape = 'u32[144,128]{1,0:T(1,128)}', space=vmem, size = 0x12000, scoped, tag = 'internal scratch']
  %s0 = inlined_call_operand.hbm [shape: f32[4,128], index: 0, kind: input, shape index: {}]
  %s1 = inlined_call_operand.hbm [shape: f32[4,128], index: 1, kind: input, shape index: {}]
  %s2 = inlined_call_operand.hbm [shape: f32[1,3,8,128], index: 2, kind: output, shape index: {}]
  %s3 = sld [smem:[#allocation0]]
  $region30: #{tpu_custom_call.1} parent=0
    _
  %s5 = ssub.s32 1, %s3
  %s6 = scalar_select 0, %s5, %s3
  $region1: #{tpu_custom_call.1} parent=0
    #allocation2 [shape = 'u8[16384]{0}', space=vmem, size = 0x4000, scoped, tag = 'input window, operand 0, single buffered']
    #allocation3 [shape = 's32[1]{0}', space=sflag, size = 0x4, scoped, tag = 'scoped memory for tpu_custom_call.1']
    #allocation4 [shape = 's32[1]{0}', space=sflag, size = 0x4, scoped, tag = 'scoped memory for tpu_custom_call.1']
    #allocation5 [shape = 'u8[16384]{0}', space=vmem, size = 0x4000, scoped, tag = 'input window, operand 1, single buffered']
    #allocation6 [shape = 's32[1]{0}', space=sflag, size = 0x4, scoped, tag = 'scoped memory for tpu_custom_call.1']
    #allocation7 [shape = 'u8[12288]{0}', space=vmem, size = 0x3000, scoped, tag = 'output window, operand 0, single buffered']
    %7 = vsyncpa [#allocation3], 0
    %8 = vsyncpa [#allocation6], 0
    %9 = vsyncpa [#allocation4], 0
    // Predicated region
    $region2: #{tpu_custom_call.1} parent=1 // pred_check
      _
    $region3: #{tpu_custom_call.1} parent=1 // pred_check_branch
      %11 = sbr.rel (0) target = $region5
    $region4: #{tpu_custom_call.1} parent=1 // pred_region
      %s12 = sadd.s32 0, 0
      %p13 = scmp.lt.s32.totalorder %s12, 0
      %s14 = scalar_select %p13, %s12, 0
      %s15 = smul.u32 8, %s14
      %s16 = ssub.s32 1, %s15
      %s17 = smul.u32 64, %s16
      %s19 = ssub.s32 512, %s17
      %20 = vsyncadd [#allocation3], %s19
      %p21 = scmp.ne.s32.totalorder 0, %s17
      %s22 = smul.addr %s15, 64
      %s23 = scalar_lea.hbm %s0, %s22
      %s24 = smul.u32 4, %s16
      %s25 = sshll.u32 [#allocation2], 4
      %s26 = int_to_ptr.vmem [resolvable:$true] %s25
      %s27 = sshll.u32 %s24, 4
      %31 = dma.hbm_to_vmem [thread:$0]  (%p21), %s23, %s27, %s26, [#allocation3], 64, 64, 4
    $region5: #{tpu_custom_call.1} parent=1 // pred_fallthru
      _
    // Predicated region
    $region6: #{tpu_custom_call.1} parent=1 // pred_check
      _
    $region7: #{tpu_custom_call.1} parent=1 // pred_check_branch
      %33 = sbr.rel (0) target = $region9
    $region8: #{tpu_custom_call.1} parent=1 // pred_region
      %s34 = sadd.s32 0, 0
      %p35 = scmp.lt.s32.totalorder %s34, 0
      %s36 = scalar_select %p35, %s34, 0
      %s37 = smul.u32 8, %s36
      %s38 = ssub.s32 1, %s37
      %s39 = smul.u32 64, %s38
      %s41 = ssub.s32 512, %s39
      %42 = vsyncadd [#allocation6], %s41
      %p43 = scmp.ne.s32.totalorder 0, %s39
      %s44 = smul.addr %s37, 64
      %s45 = scalar_lea.hbm %s1, %s44
      %s46 = smul.u32 4, %s38
      %s47 = sshll.u32 [#allocation5], 4
      %s48 = int_to_ptr.vmem [resolvable:$true] %s47
      %s49 = sshll.u32 %s46, 4
      %53 = dma.hbm_to_vmem [thread:$0]  (%p43), %s45, %s49, %s48, [#allocation6], 64, 64, 4
    $region9: #{tpu_custom_call.1} parent=1 // pred_fallthru
      _
    // Predicated region
    $region10: #{tpu_custom_call.1} parent=1 // pred_check
      _
    $region11: #{tpu_custom_call.1} parent=1 // pred_check_branch
      %55 = sbr.rel (0) target = $region13
    $region12: #{tpu_custom_call.1} parent=1 // pred_region
      %56 = dma.done [#allocation3], 512
    $region13: #{tpu_custom_call.1} parent=1 // pred_fallthru
      _
    // Predicated region
    $region14: #{tpu_custom_call.1} parent=1 // pred_check
      _
    $region15: #{tpu_custom_call.1} parent=1 // pred_check_branch
      %58 = sbr.rel (0) target = $region17
    $region16: #{tpu_custom_call.1} parent=1 // pred_region
      %59 = dma.done [#allocation6], 512
    $region17: #{tpu_custom_call.1} parent=1 // pred_fallthru
      _
    %s60 = sadd.s32 0, 0
    %p61 = scmp.lt.s32.totalorder %s60, 0
    %s62 = scalar_select %p61, %s60, 0
    %s63 = smul.u32 8, %s62
    %s64 = ssub.s32 1, %s63
    %s65 = smul.u32 64, %s64
    %s66 = sadd.s32 0, 0
    %p67 = scmp.lt.s32.totalorder %s66, 0
    %s68 = scalar_select %p67, %s66, 0
    %s69 = smul.u32 8, %s68
    %s70 = ssub.s32 1, %s69
    %s71 = smul.u32 64, %s70
    %p72 = scmp.eq.s32.totalorder 0, 0
    // Predicated region
    $region18: #{tpu_custom_call.1} parent=1 // pred_check
      %p73 = pneg %p72
    $region19: #{tpu_custom_call.1} parent=1 // pred_check_branch
      %75 = sbr.rel (%p73) target = $region21
    $region20: #{tpu_custom_call.1} parent=1 // pred_region
      %76 = vst [vmem:[#allocation7] sm:$0xff] 0.0
      %77 = vst [vmem:[#allocation7 + $0x8] sm:$0xff] 0.0
      %78 = vst [vmem:[#allocation7 + $0x10] sm:$0xff] 0.0
    $region21: #{tpu_custom_call.1} parent=1 // pred_fallthru
      _
    %v79 = vld [vmem:[#allocation2] sm:$0xff]
    %v80 = vld [vmem:[#allocation2 + $0x8] sm:$0xff]
    %v81 = vld [vmem:[#allocation2 + $0x10] sm:$0xff]
    %v82 = vld [vmem:[#allocation2 + $0x18] sm:$0xff]
    %v83 = vld [vmem:[#allocation5] sm:$0xff]
    %v84 = vld [vmem:[#allocation5 + $0x8] sm:$0xff]
    %v85 = vld [vmem:[#allocation5 + $0x10] sm:$0xff]
    %v86 = vld [vmem:[#allocation5 + $0x18] sm:$0xff]
    %v87 = vmul.f32 %v79, 0.5
    %v88 = vmul.f32 %v80, 0.5
    %v89 = vmul.f32 %v81, 0.5
    %v90 = vmul.f32 %v82, 0.5
    %v91 = vtanh.pop %v87
    %v92 = vtanh.pop %v88
    %v93 = vtanh.pop %v89
    %v94 = vtanh.pop %v90
    %v95 = vmul.f32 %v91, 0.5
    %v96 = vmul.f32 %v92, 0.5
    %v97 = vmul.f32 %v93, 0.5
    %v98 = vmul.f32 %v94, 0.5
    %v99 = vadd.f32 %v95, 0.5
    %v100 = vadd.f32 %v96, 0.5
    %v101 = vadd.f32 %v97, 0.5
    %v102 = vadd.f32 %v98, 0.5
    %s103 = sadd.s32 0, 0
    %s104 = smul.u32 %s103, 32
    %v105 = vlaneseq
    %v106 = vshrl.u32 %v105, 7
    %v107 = vadd.s32 %v106, 8
    %v108 = vadd.s32 %v106, 16
    %v109 = vadd.s32 %v106, 24
    %v110 = vstv %s104
    %v111 = vadd.s32 %v106, %v110
    %v112 = vadd.s32 %v107, %v110
    %v113 = vadd.s32 %v108, %v110
    %v114 = vadd.s32 %v109, %v110
    %vm115 = vcmp.lt.s32.totalorder %v111, 4
    %vm116 = vcmp.lt.s32.totalorder %v112, 4
    %vm117 = vcmp.lt.s32.totalorder %v113, 4
    %vm118 = vcmp.lt.s32.totalorder %v114, 4
    %v119 = vsel %vm115, 1, 0
    %v120 = vsel %vm116, 1, 0
    %v121 = vsel %vm117, 1, 0
    %v122 = vsel %vm118, 1, 0
    %vm123 = vcmp.eq.s32.totalorder %v119, 1
    %vm124 = vcmp.eq.s32.totalorder %v120, 1
    %vm125 = vcmp.eq.s32.totalorder %v121, 1
    %vm126 = vcmp.eq.s32.totalorder %v122, 1
    %v127 = vsel %vm123, %v99, 0.0
    %v128 = vsel %vm124, %v100, 0.0
    %v129 = vsel %vm125, %v101, 0.0
    %v130 = vsel %vm126, %v102, 0.0
    %v131 = vsel %vm123, %v83, 0.0
    %v132 = vsel %vm124, %v84, 0.0
    %v133 = vsel %vm125, %v85, 0.0
    %v134 = vsel %vm126, %v86, 0.0
    %v135 = vld [vmem:[#allocation7] sm:$0xff]
    %v136 = vmul.f32 %v127, %v131
    %v137 = vmul.f32 %v128, %v132
    %v138 = vmul.f32 %v129, %v133
    %v139 = vmul.f32 %v130, %v134
    %v140 = vadd.f32 %v136, %v137
    %v141 = vadd.f32 %v140, %v138
    %v142 = vadd.f32 %v141, %v139
    %v143 = vadd.f32 %v135, %v142
    %144 = vst [vmem:[#allocation7] sm:$0xff] %v143
    %s145 = scalar_lea.vmem [#allocation7], 8
    %v146 = vld [vmem:[%s145] sm:$0xff]
    %v147 = vadd.f32 %v127, %v128
    %v148 = vadd.f32 %v147, %v129
    %v149 = vadd.f32 %v148, %v130
    %v150 = vadd.f32 %v146, %v149
    %151 = vst [vmem:[%s145] sm:$0xff] %v150
    %s152 = scalar_lea.vmem [#allocation7], 16
    %v153 = vld [vmem:[%s152] sm:$0xff]
    %v154 = vadd.f32 %v131, %v132
    %v155 = vadd.f32 %v154, %v133
    %v156 = vadd.f32 %v155, %v134
    %v157 = vadd.f32 %v153, %v156
    %158 = vst [vmem:[%s152] sm:$0xff] %v157
    // Predicated region
    $region22: #{tpu_custom_call.1} parent=1 // pred_check
      _
    $region23: #{tpu_custom_call.1} parent=1 // pred_check_branch
      %160 = sbr.rel (0) target = $region25
    $region24: #{tpu_custom_call.1} parent=1 // pred_region
      %s162 = ssub.s32 384, 384
      %163 = vsyncadd [#allocation4], %s162
      %s164 = sshll.u32 [#allocation7], 4
      %s165 = int_to_ptr.vmem [resolvable:$true] %s164
      %170 = dma.vmem_to_hbm [thread:$0]  %s165, 384, %s2, [#allocation4], 128, 128, 8
    $region25: #{tpu_custom_call.1} parent=1 // pred_fallthru
      _
    // Predicated region
    $region26: #{tpu_custom_call.1} parent=1 // pred_check
      _
    $region27: #{tpu_custom_call.1} parent=1 // pred_check_branch
      %172 = sbr.rel (0) target = $region29
    $region28: #{tpu_custom_call.1} parent=1 // pred_region
      %173 = dma.done [#allocation4], 384
    $region29: #{tpu_custom_call.1} parent=1 // pred_fallthru
      _
    %174 = vsyncpa [#allocation3], 1
    %175 = vsyncpa [#allocation6], 1
    %176 = vsyncpa [#allocation4], 1

</llo_original>
